<compile_context>
chip_gen: v6e
topology: v6e:2x2x1
jax: 0.10.0
libtpu: 0.0.40
codegen_flags: <defaults>
</compile_context>

<pallas_src>
import jax
import jax.numpy as jnp
from jax.experimental import pallas as pl
from jax.experimental.pallas import tpu as pltpu


def _router_kernel(x_ref, w_ref, b_ref, probs_ref, idx_ref, logits_ref):
    # x_ref: (TM, H) in x dtype; w_ref: (H, E) in x dtype; b_ref: (1, E) f32.
    x = x_ref[...]
    logits = jnp.dot(x, w_ref[...], preferred_element_type=jnp.float32)
    logits = logits + b_ref[...]                               # (TM, E) f32
    logits_ref[...] = logits.astype(logits_ref.dtype)          # single dense store

    tm, E = logits.shape
    col = jax.lax.broadcasted_iota(jnp.int32, (tm, E), 1)      # expert id per lane
    sentinel = jnp.int32(E)

    # Top-2 over experts (lane axis), first-occurrence tie-break to match
    # torch.topk / jax.lax.top_k.  Softmax is monotonic, so selecting on the
    # logits is equivalent to selecting on the probabilities.
    l1 = jnp.max(logits, axis=-1, keepdims=True)                          # (TM, 1)
    i1 = jnp.min(jnp.where(logits == l1, col, sentinel), axis=-1, keepdims=True)
    masked = jnp.where(col == i1, -jnp.inf, logits)
    l2 = jnp.max(masked, axis=-1, keepdims=True)
    i2 = jnp.min(jnp.where(masked == l2, col, sentinel), axis=-1, keepdims=True)

    # Renormalized top-2 probabilities == softmax over just the two picks.
    # Exact reciprocal (not approx): probabilities may feed aux losses.
    e2 = jnp.exp(l2 - l1)                                      # in (0, 1]
    p1 = 1.0 / (1.0 + e2)
    p2 = e2 * p1

    # One dense store per output (no 1-sublane masked stores).
    lane = jax.lax.broadcasted_iota(jnp.int32, (tm, 2), 1)
    probs_ref[...] = jnp.where(lane == 0, p1, p2)
    idx_ref[...] = jnp.where(lane == 0, i1, i2)


def _round_up(v, m):
    return -(-v // m) * m


def _vmem_budget():
    """Per-generation VMEM plan: explicit vmem_limit_bytes = phys/2
    (64 MiB on v5e/v6e's 128 MiB physical, 32 MiB on v7x's 64 MiB), and a tile
    budget at 75% of that limit to leave headroom for pipeline internals."""
    try:
        phys = int(pltpu.get_tpu_info().vmem_capacity_bytes)
    except Exception:
        phys = 64 * 1024 * 1024          # conservative fallback (v7x per-TC)
    vmem_limit = phys // 2
    budget = (vmem_limit * 3) // 4
    return budget, vmem_limit


def _choose_tm(T, H, E, x_itemsize, budget):
    """Token tile size from honest (padded, double-buffered) VMEM accounting."""
    lanes_H = _round_up(H, 128)
    lanes_E = _round_up(E, 128)
    # Per-token bytes across all streamed blocks, each double-buffered (x2):
    #   x (tm, H) in x dtype; logits (tm, E), probs (tm, 2), idx (tm, 2) in 32b.
    per_tok = 2 * (lanes_H * x_itemsize + lanes_E * 4 + 128 * 4 + 128 * 4)
    # Weights/bias: constant index_map, but the default pipeline still reserves
    # two buffers each -- count both copies.
    fixed = 2 * (_round_up(H, 8) * lanes_E * x_itemsize + 8 * lanes_E * 4)
    cap = max(128, ((budget - fixed) // max(per_tok, 1)) // 128 * 128)
    cap = min(cap, 2048)
    if T <= cap and T < 256:
        return T                          # single full-array block
    # Guarantee >= 2 grid steps once T is large enough so the "parallel" axis
    # can shard across v7x's two TensorCores (neutral on 1-TC v5e/v6e).
    two_step = _round_up(pl.cdiv(T, 2), 128)
    return min(cap, two_step)


def dynamic_router(x, w, b, *, tm=None):
    """Pallas port of DynamicRouter.forward.

    x: (B, S, H); w: (H, E) router weight stored input-major (logits = x @ w + b,
    i.e. the nn.Linear weight transposed); b: (E,).
    Returns (top_k_probs (B,S,2) f32, top_k_indices (B,S,2) int32,
             routing_logits (B,S,E) in x.dtype).
    """
    B, S, H = x.shape
    E = w.shape[1]
    assert E >= 2, "top-2 routing needs at least 2 experts"
    T = B * S

    x2 = x.reshape(T, H)
    w_in = w.astype(x.dtype)                       # MXU-native dtype, f32 accum
    b_in = b.reshape(1, E).astype(jnp.float32)

    budget, vmem_limit = _vmem_budget()
    if tm is None:
        tm = _choose_tm(T, H, E, x2.dtype.itemsize, budget)
    tm = min(tm, T)
    if tm < T:
        assert tm % 128 == 0, "token tile must be a multiple of 128 when tm < T"
    n_steps = pl.cdiv(T, tm)                       # last block may be partial

    # Bytes-dominated profile: the kernel is HBM-read bound on x.
    cost = pl.CostEstimate(
        flops=2 * T * H * E,
        transcendentals=T,
        bytes_accessed=(T * H * x2.dtype.itemsize
                        + E * H * w_in.dtype.itemsize + E * 4
                        + T * E * x.dtype.itemsize + T * 2 * 4 + T * 2 * 4),
    )

    probs, idx, logits = pl.pallas_call(
        _router_kernel,
        out_shape=(
            jax.ShapeDtypeStruct((T, 2), jnp.float32),   # top-2 probs
            jax.ShapeDtypeStruct((T, 2), jnp.int32),     # top-2 indices
            jax.ShapeDtypeStruct((T, E), x.dtype),       # routing logits
        ),
        grid_spec=pltpu.PrefetchScalarGridSpec(
            num_scalar_prefetch=0,
            grid=(n_steps,),
            in_specs=[
                pl.BlockSpec((tm, H), lambda i: (i, 0)),
                # Constant block index -> weights/bias stay VMEM-resident.
                pl.BlockSpec((H, E), lambda i: (0, 0)),
                pl.BlockSpec((1, E), lambda i: (0, 0)),
            ],
            out_specs=[
                pl.BlockSpec((tm, 2), lambda i: (i, 0)),
                pl.BlockSpec((tm, 2), lambda i: (i, 0)),
                pl.BlockSpec((tm, E), lambda i: (i, 0)),
            ],
        ),
        compiler_params=pltpu.CompilerParams(
            dimension_semantics=("parallel",),
            vmem_limit_bytes=vmem_limit,
        ),
        cost_estimate=cost,
    )(x2, w_in, b_in)

    # Pure reshapes (no transpose, no slice, no pad) -- zero extra HBM passes.
    return (probs.reshape(B, S, 2),
            idx.reshape(B, S, 2),
            logits.reshape(B, S, E))


if __name__ == "__main__":
    # Config: hidden_size=32, num_experts=8 (expert_capacity unused in forward).
    B, S, H, E = 2, 8, 32, 8

    key = jax.random.PRNGKey(0)
    kx, kw, kb = jax.random.split(key, 3)

    bound = 1.0 / (H ** 0.5)                       # nn.Linear-style init
    w = jax.random.uniform(kw, (H, E), jnp.float32, -bound, bound)
    b = jax.random.uniform(kb, (E,), jnp.float32, -bound, bound)
    x = jax.random.normal(kx, (B, S, H), jnp.float32)

    top_k_probs, top_k_indices, routing_logits = dynamic_router(x, w, b)
    jax.block_until_ready((top_k_probs, top_k_indices, routing_logits))

    def _ref(xx):
        logits = xx @ w + b
        probs = jax.nn.softmax(logits, axis=-1)
        tp, ti = jax.lax.top_k(probs, 2)
        return tp / tp.sum(axis=-1, keepdims=True), ti, logits

    ref_p, ref_i, ref_l = _ref(x)
    assert jnp.allclose(routing_logits, ref_l, atol=1e-4)   # MXU accum-order diff
    assert jnp.allclose(top_k_probs, ref_p, atol=1e-4)
    assert jnp.array_equal(top_k_indices, ref_i)

    # Multi-step grid with a ragged (partial) last block, no wrapper-side pad:
    # T = 400, tm = 128 -> 4 steps, last block has 16 valid token rows.
    x_big = jax.random.normal(jax.random.PRNGKey(1), (4, 100, H), jnp.float32)
    p_big, i_big, l_big = dynamic_router(x_big, w, b, tm=128)
    jax.block_until_ready((p_big, i_big, l_big))
    ref_p, ref_i, ref_l = _ref(x_big)
    assert jnp.allclose(l_big, ref_l, atol=1e-4)
    assert jnp.allclose(p_big, ref_p, atol=1e-4)
    assert jnp.array_equal(i_big, ref_i)

    # Auto-tiled path: T = 400 -> tm = 256 (>= 2 steps), partial tail handled.
    p_a, i_a, l_a = dynamic_router(x_big, w, b)
    jax.block_until_ready((p_a, i_a, l_a))
    assert jnp.allclose(l_a, ref_l, atol=1e-4)
    assert jnp.allclose(p_a, ref_p, atol=1e-4)
    assert jnp.array_equal(i_a, ref_i)

    print("KERNEL_OK")
</pallas_src>

<mosaic_0001>
module attributes {stable_mosaic.version = 11 : i64} {
  func.func @_router_kernel(%arg0: i32, %arg1: memref<16x32xf32, #tpu.memory_space<vmem>>, %arg2: memref<32x8xf32, #tpu.memory_space<vmem>>, %arg3: memref<1x8xf32, #tpu.memory_space<vmem>>, %arg4: memref<16x2xf32, #tpu.memory_space<vmem>>, %arg5: memref<16x2xi32, #tpu.memory_space<vmem>>, %arg6: memref<16x8xf32, #tpu.memory_space<vmem>>) attributes {dimension_semantics = [#tpu.dimension_semantics<parallel>], iteration_bounds = array<i64: 1>, scalar_prefetch = 0 : i64, scratch_operands = 0 : i64, tpu.core_type = #tpu.core_type<tc>, window_params = [{transform_indices = @transform_0, window_bounds = array<i64: 16, 32>}, {pipeline_mode = #tpu.pipeline_mode<synchronous>, transform_indices = @transform_1, window_bounds = array<i64: 32, 8>}, {pipeline_mode = #tpu.pipeline_mode<synchronous>, transform_indices = @transform_2, window_bounds = array<i64: 1, 8>}, {transform_indices = @transform_3, window_bounds = array<i64: 16, 2>}, {transform_indices = @transform_4, window_bounds = array<i64: 16, 2>}, {transform_indices = @transform_5, window_bounds = array<i64: 16, 8>}]} {
    %c0 = arith.constant 0 : index
    %c0_0 = arith.constant 0 : index
    %0 = vector.load %arg1[%c0, %c0_0] : memref<16x32xf32, #tpu.memory_space<vmem>>, vector<16x32xf32>
    %c0_1 = arith.constant 0 : index
    %c0_2 = arith.constant 0 : index
    %1 = vector.load %arg2[%c0_1, %c0_2] : memref<32x8xf32, #tpu.memory_space<vmem>>, vector<32x8xf32>
    %cst = arith.constant dense<0.000000e+00> : vector<16x8xf32>
    %2 = tpu.matmul %0, %1, %cst {dimension_numbers = #tpu.dot_dimension_numbers<[1], [0], [0], [1], [0, 0, 1, 1], [], []>} : vector<16x32xf32>, vector<32x8xf32>, vector<16x8xf32> -> vector<16x8xf32>
    %c0_3 = arith.constant 0 : index
    %c0_4 = arith.constant 0 : index
    %3 = vector.load %arg3[%c0_3, %c0_4] : memref<1x8xf32, #tpu.memory_space<vmem>>, vector<1x8xf32>
    %4 = vector.broadcast %3 : vector<1x8xf32> to vector<16x8xf32>
    %5 = arith.addf %2, %4 : vector<16x8xf32>
    %c0_5 = arith.constant 0 : index
    %c0_6 = arith.constant 0 : index
    %6 = vector.load %arg6[%c0_5, %c0_6] : memref<16x8xf32, #tpu.memory_space<vmem>>, vector<16x8xf32>
    tpu.vector_store %arg6[%c0_5, %c0_6], %5 {strides = array<i32>} : memref<16x8xf32, #tpu.memory_space<vmem>>, vector<16x8xf32>,
    %7 = tpu.iota {dimensions = array<i32: 1>} : vector<16x8xi32>
    %cst_7 = arith.constant dense<0xFF800000> : vector<16xf32>
    %8 = vector.multi_reduction <maximumf>, %5, %cst_7 [1] : vector<16x8xf32> to vector<16xf32>
    %9 = vector.shape_cast %8 : vector<16xf32> to vector<16x1xf32>
    %10 = vector.broadcast %9 : vector<16x1xf32> to vector<16x8xf32>
    %11 = arith.cmpf oeq, %5, %10 : vector<16x8xf32>
    %c8_i32 = arith.constant 8 : i32
    %12 = vector.broadcast %c8_i32 : i32 to vector<16x8xi32>
    %13 = arith.select %11, %7, %12 : vector<16x8xi1>, vector<16x8xi32>
    %cst_8 = arith.constant dense<2147483647> : vector<16xi32>
    %14 = vector.multi_reduction <minsi>, %13, %cst_8 [1] : vector<16x8xi32> to vector<16xi32>
    %15 = vector.shape_cast %14 : vector<16xi32> to vector<16x1xi32>
    %16 = vector.broadcast %15 : vector<16x1xi32> to vector<16x8xi32>
    %17 = arith.cmpi eq, %7, %16 : vector<16x8xi32>
    %cst_9 = arith.constant 0xFF800000 : f32
    %18 = vector.broadcast %cst_9 : f32 to vector<16x8xf32>
    %19 = arith.select %17, %18, %5 : vector<16x8xi1>, vector<16x8xf32>
    %cst_10 = arith.constant dense<0xFF800000> : vector<16xf32>
    %20 = vector.multi_reduction <maximumf>, %19, %cst_10 [1] : vector<16x8xf32> to vector<16xf32>
    %21 = vector.shape_cast %20 : vector<16xf32> to vector<16x1xf32>
    %22 = vector.broadcast %21 : vector<16x1xf32> to vector<16x8xf32>
    %23 = arith.cmpf oeq, %19, %22 : vector<16x8xf32>
    %c8_i32_11 = arith.constant 8 : i32
    %24 = vector.broadcast %c8_i32_11 : i32 to vector<16x8xi32>
    %25 = arith.select %23, %7, %24 : vector<16x8xi1>, vector<16x8xi32>
    %cst_12 = arith.constant dense<2147483647> : vector<16xi32>
    %26 = vector.multi_reduction <minsi>, %25, %cst_12 [1] : vector<16x8xi32> to vector<16xi32>
    %27 = vector.shape_cast %26 : vector<16xi32> to vector<16x1xi32>
    %28 = arith.subf %21, %9 : vector<16x1xf32>
    %29 = math.exp %28 : vector<16x1xf32>
    %cst_13 = arith.constant 1.000000e+00 : f32
    %30 = vector.broadcast %cst_13 : f32 to vector<16x1xf32>
    %31 = arith.addf %30, %29 : vector<16x1xf32>
    %cst_14 = arith.constant 1.000000e+00 : f32
    %32 = vector.broadcast %cst_14 : f32 to vector<16x1xf32>
    %33 = arith.divf %32, %31 : vector<16x1xf32>
    %34 = arith.mulf %29, %33 : vector<16x1xf32>
    %35 = tpu.iota {dimensions = array<i32: 1>} : vector<16x2xi32>
    %c0_i32 = arith.constant 0 : i32
    %36 = vector.broadcast %c0_i32 : i32 to vector<16x2xi32>
    %37 = arith.cmpi eq, %35, %36 : vector<16x2xi32>
    %38 = vector.shape_cast %33 : vector<16x1xf32> to vector<16x1xf32>
    %39 = vector.broadcast %38 : vector<16x1xf32> to vector<16x2xf32>
    %40 = vector.shape_cast %34 : vector<16x1xf32> to vector<16x1xf32>
    %41 = vector.broadcast %40 : vector<16x1xf32> to vector<16x2xf32>
    %42 = arith.select %37, %39, %41 : vector<16x2xi1>, vector<16x2xf32>
    %c0_15 = arith.constant 0 : index
    %c0_16 = arith.constant 0 : index
    %43 = vector.load %arg4[%c0_15, %c0_16] : memref<16x2xf32, #tpu.memory_space<vmem>>, vector<16x2xf32>
    tpu.vector_store %arg4[%c0_15, %c0_16], %42 {strides = array<i32>} : memref<16x2xf32, #tpu.memory_space<vmem>>, vector<16x2xf32>,
    %c0_i32_17 = arith.constant 0 : i32
    %44 = vector.broadcast %c0_i32_17 : i32 to vector<16x2xi32>
    %45 = arith.cmpi eq, %35, %44 : vector<16x2xi32>
    %46 = vector.shape_cast %15 : vector<16x1xi32> to vector<16x1xi32>
    %47 = vector.broadcast %46 : vector<16x1xi32> to vector<16x2xi32>
    %48 = vector.shape_cast %27 : vector<16x1xi32> to vector<16x1xi32>
    %49 = vector.broadcast %48 : vector<16x1xi32> to vector<16x2xi32>
    %50 = arith.select %45, %47, %49 : vector<16x2xi1>, vector<16x2xi32>
    %c0_18 = arith.constant 0 : index
    %c0_19 = arith.constant 0 : index
    %51 = vector.load %arg5[%c0_18, %c0_19] : memref<16x2xi32, #tpu.memory_space<vmem>>, vector<16x2xi32>
    tpu.vector_store %arg5[%c0_18, %c0_19], %50 {strides = array<i32>} : memref<16x2xi32, #tpu.memory_space<vmem>>, vector<16x2xi32>,
    return
  }
  func.func @transform_0(%arg0: i32) -> (i32, i32) {
    %c0_i32 = arith.constant 0 : i32
    %c0_i32_0 = arith.constant 0 : i32
    return %arg0, %c0_i32 : i32, i32
  }
  func.func @transform_1(%arg0: i32) -> (i32, i32) {
    %c0_i32 = arith.constant 0 : i32
    %c0_i32_0 = arith.constant 0 : i32
    %c0_i32_1 = arith.constant 0 : i32
    return %c0_i32, %c0_i32_0 : i32, i32
  }
  func.func @transform_2(%arg0: i32) -> (i32, i32) {
    %c0_i32 = arith.constant 0 : i32
    %c0_i32_0 = arith.constant 0 : i32
    %c0_i32_1 = arith.constant 0 : i32
    return %c0_i32, %c0_i32_0 : i32, i32
  }
  func.func @transform_3(%arg0: i32) -> (i32, i32) {
    %c0_i32 = arith.constant 0 : i32
    %c0_i32_0 = arith.constant 0 : i32
    return %arg0, %c0_i32 : i32, i32
  }
  func.func @transform_4(%arg0: i32) -> (i32, i32) {
    %c0_i32 = arith.constant 0 : i32
    %c0_i32_0 = arith.constant 0 : i32
    return %arg0, %c0_i32 : i32, i32
  }
  func.func @transform_5(%arg0: i32) -> (i32, i32) {
    %c0_i32 = arith.constant 0 : i32
    %c0_i32_0 = arith.constant 0 : i32
    return %arg0, %c0_i32 : i32, i32
  }
}

</mosaic_0001>

<llo_original>
// kernel: tpu_custom_call.1
$region0: #{tpu_custom_call.1}
  #allocation0 [shape = 'u32[]', space=smem, size = 0x4, offset = 0x4, fixed_abs, tag = 'smem constant byte address 0x4 - core index']
  #allocation1 [shape = 'u32[144,128]{1,0:T(1,128)}', space=vmem, size = 0x12000, scoped, tag = 'internal scratch']
  %s0 = inlined_call_operand.vmem [shape: f32[16,32], index: 0, kind: input, shape index: {}]
  %s1 = inlined_call_operand.vmem [shape: f32[32,8], index: 1, kind: input, shape index: {}]
  %s2 = inlined_call_operand.vmem [shape: f32[1,8], index: 2, kind: input, shape index: {}]
  %s3 = inlined_call_operand.vmem [shape: f32[16,2], index: 3, kind: output, shape index: {0}]
  %s4 = inlined_call_operand.vmem [shape: s32[16,2], index: 4, kind: output, shape index: {1}]
  %s5 = inlined_call_operand.vmem [shape: f32[16,8], index: 5, kind: output, shape index: {2}]
  %6 = xla_tuple %s3, %s4, %s5
  %s7 = sld [smem:[#allocation0]]
  $region38: #{tpu_custom_call.1} parent=0
    _
  %s9 = ssub.s32 1, %s7
  %s10 = scalar_select 0, %s9, %s7
  // Predicated region
  $region2: #{tpu_custom_call.1} parent=0 // pred_check
    _
  $region3: #{tpu_custom_call.1} parent=0 // pred_check_branch
    %12 = sbr.rel (0) target = $region5
  $region4: #{tpu_custom_call.1} parent=0 // pred_region
    _
  $region5: #{tpu_custom_call.1} parent=0 // pred_fallthru
    _
  // Predicated region
  $region6: #{tpu_custom_call.1} parent=0 // pred_check
    _
  $region7: #{tpu_custom_call.1} parent=0 // pred_check_branch
    %14 = sbr.rel (0) target = $region9
  $region8: #{tpu_custom_call.1} parent=0 // pred_region
    _
  $region9: #{tpu_custom_call.1} parent=0 // pred_fallthru
    _
  // Predicated region
  $region10: #{tpu_custom_call.1} parent=0 // pred_check
    _
  $region11: #{tpu_custom_call.1} parent=0 // pred_check_branch
    %16 = sbr.rel (0) target = $region13
  $region12: #{tpu_custom_call.1} parent=0 // pred_region
    _
  $region13: #{tpu_custom_call.1} parent=0 // pred_fallthru
    _
  %v17 = vld [vmem:[%s0] sm:$0xff]
  %v18 = vld [vmem:[%s0 + $0x8] sm:$0xff]
  %v19 = vld [vmem:[%s1] sm:$0xff]
  %v20 = vld [vmem:[%s1 + $0x8] sm:$0xff]
  %v21 = vld [vmem:[%s1 + $0x10] sm:$0xff]
  %v22 = vld [vmem:[%s1 + $0x18] sm:$0xff]
  %v23 = vld [vmem:[%s2] sm:$0x1]
  %v25 = vlaneseq
  %v26 = vshrl.u32 %v25, 7
  %v27 = vsub.s32 0, %v26
  %v28 = vrot.slane %v23, %v27
  %vm30 = vcmask 261120
  %v32 = vsel %vm30, %v17, 0
  %v35 = vsel %vm30, %v18, 0
  %37 = vmatprep.subr.mxu0 0.0
  %38 = vmatpush1.msra.mxu0 0.0
  %39 = vmatprep.subr.mxu0 0.0
  %40 = vmatpush1.msra.mxu0 0.0
  %41 = vmatprep.subr.mxu0 0.0
  %42 = vmatpush1.msra.mxu0 0.0
  %43 = vmatprep.subr.mxu0 0.0
  %44 = vmatpush1.msra.mxu0 0.0
  %45 = vmatprep.subr.mxu0 0.0
  %46 = vmatpush1.msra.mxu0 0.0
  %47 = vmatprep.subr.mxu0 0.0
  %48 = vmatpush1.msra.mxu0 0.0
  %49 = vmatprep.subr.mxu0 0.0
  %50 = vmatpush1.msra.mxu0 0.0
  %51 = vmatprep.subr.mxu0 0.0
  %52 = vmatpush1.msra.mxu0 0.0
  %53 = vmatprep.subr.mxu0 0.0
  %54 = vmatpush1.msra.mxu0 0.0
  %55 = vmatprep.subr.mxu0 0.0
  %56 = vmatpush1.msra.mxu0 0.0
  %57 = vmatprep.subr.mxu0 0.0
  %58 = vmatpush1.msra.mxu0 0.0
  %59 = vmatprep.subr.mxu0 0.0
  %60 = vmatpush1.msra.mxu0 0.0
  %61 = vmatprep.subr.mxu0 0.0
  %62 = vmatpush1.msra.mxu0 %v22
  %63 = vmatprep.subr.mxu0 0.0
  %64 = vmatpush1.msra.mxu0 %v21
  %65 = vmatprep.subr.mxu0 0.0
  %66 = vmatpush1.msra.mxu0 %v20
  %67 = vmatprep.subr.mxu0 0.0
  %68 = vmatpush1.msra.mxu0 %v19
  %69 = vmatprep.subr.mxu0 0.0
  %70 = vmatpush2.msra.mxu0 0.0
  %71 = vmatprep.subr.mxu0 0.0
  %72 = vmatpush2.msra.mxu0 0.0
  %73 = vmatprep.subr.mxu0 0.0
  %74 = vmatpush2.msra.mxu0 0.0
  %75 = vmatprep.subr.mxu0 0.0
  %76 = vmatpush2.msra.mxu0 0.0
  %77 = vmatprep.subr.mxu0 0.0
  %78 = vmatpush2.msra.mxu0 0.0
  %79 = vmatprep.subr.mxu0 0.0
  %80 = vmatpush2.msra.mxu0 0.0
  %81 = vmatprep.subr.mxu0 0.0
  %82 = vmatpush2.msra.mxu0 0.0
  %83 = vmatprep.subr.mxu0 0.0
  %84 = vmatpush2.msra.mxu0 0.0
  %85 = vmatprep.subr.mxu0 0.0
  %86 = vmatpush2.msra.mxu0 0.0
  %87 = vmatprep.subr.mxu0 0.0
  %88 = vmatpush2.msra.mxu0 0.0
  %89 = vmatprep.subr.mxu0 0.0
  %90 = vmatpush2.msra.mxu0 0.0
  %91 = vmatprep.subr.mxu0 0.0
  %92 = vmatpush2.msra.mxu0 0.0
  %93 = vmatprep.subr.mxu0 0.0
  %94 = vmatpush2.msra.mxu0 0.0
  %95 = vmatprep.subr.mxu0 0.0
  %96 = vmatpush2.msra.mxu0 0.0
  %97 = vmatprep.subr.mxu0 0.0
  %98 = vmatpush2.msra.mxu0 0.0
  %99 = vmatprep.subr.mxu0 0.0
  %100 = vmatpush2.msra.mxu0 0.0
  %101 = vmatprep.mubr.f32.mxu0 0.0
  %102 = vmatmul.mubr.f32.gmra.mxu0 %v32
  %v103 = vpop.f32.mrf.mxu0
  %v104 = vadd.f32 %v28, %v103
  %v105 = vpop.f32.mrf.mxu0
  %106 = vmatprep.mubr.f32.mxu0 0.0
  %107 = vmatmul.mubr.f32.gmra.mxu0 %v35
  %v108 = vpop.f32.mrf.mxu0
  %v109 = vadd.f32 %v28, %v108
  %v110 = vpop.f32.mrf.mxu0
  %111 = vdwg.mxu0
  %vm112 = vcmask 64512
  %113 = vst.msk [vmem:[%s5] sm:$0xff] %vm112, %v104
  %114 = vst.msk [vmem:[%s5 + $0x8] sm:$0xff] %vm112, %v109
  %v115 = vlaneseq
  %v116 = vand.u32 %v115, 127
  %v117 = vsel %vm112, %v104, -inf
  %118 = vmax.xlane.f32.xlu0 %v117
  %v119 = vpop.xlane.xlu0 %118
  %v120 = vsel %vm112, %v109, -inf
  %121 = vmax.xlane.f32.xlu0 %v120
  %v122 = vpop.xlane.xlu0 %121
  %vm123 = vcmp.eq.f32.partialorder %v104, %v119
  %vm124 = vcmp.eq.f32.partialorder %v109, %v122
  %v125 = vsel %vm123, %v116, 8
  %v126 = vsel %vm124, %v116, 8
  %v127 = vsel %vm112, %v125, 2147483647
  %v128 = vand.u32 %v127, 65535
  %v129 = vshra.s32 %v127, 16
  %v130 = vcvt.s32.f32 %v128
  %v131 = vcvt.s32.f32 %v129
  %132 = vmin.xlane.f32.xlu0 %v131
  %v133 = vpop.xlane.xlu0 %132
  %vm134 = vcmp.eq.f32.partialorder %v131, %v133
  %v135 = vsel %vm134, %v130, inf
  %136 = vmin.xlane.f32.xlu0 %v135
  %v137 = vpop.xlane.xlu0 %136
  %v138 = vcvt.f32.s32 %v137
  %v139 = vcvt.f32.s32 %v133
  %v140 = vshll.u32 %v139, 16
  %v141 = vadd.s32 %v140, %v138
  %v142 = vsel %vm112, %v126, 2147483647
  %v143 = vand.u32 %v142, 65535
  %v144 = vshra.s32 %v142, 16
  %v145 = vcvt.s32.f32 %v143
  %v146 = vcvt.s32.f32 %v144
  %147 = vmin.xlane.f32.xlu0 %v146
  %v148 = vpop.xlane.xlu0 %147
  %vm149 = vcmp.eq.f32.partialorder %v146, %v148
  %v150 = vsel %vm149, %v145, inf
  %151 = vmin.xlane.f32.xlu0 %v150
  %v152 = vpop.xlane.xlu0 %151
  %v153 = vcvt.f32.s32 %v152
  %v154 = vcvt.f32.s32 %v148
  %v155 = vshll.u32 %v154, 16
  %v156 = vadd.s32 %v155, %v153
  %vm157 = vcmp.eq.s32.totalorder %v116, %v141
  %vm158 = vcmp.eq.s32.totalorder %v116, %v156
  %v159 = vsel %vm157, -inf, %v104
  %v160 = vsel %vm158, -inf, %v109
  %v161 = vsel %vm112, %v159, -inf
  %162 = vmax.xlane.f32.xlu0 %v161
  %v163 = vpop.xlane.xlu0 %162
  %v164 = vsel %vm112, %v160, -inf
  %165 = vmax.xlane.f32.xlu0 %v164
  %v166 = vpop.xlane.xlu0 %165
  %vm167 = vcmp.eq.f32.partialorder %v159, %v163
  %vm168 = vcmp.eq.f32.partialorder %v160, %v166
  %v169 = vsel %vm167, %v116, 8
  %v170 = vsel %vm168, %v116, 8
  %v171 = vsel %vm112, %v169, 2147483647
  %v172 = vand.u32 %v171, 65535
  %v173 = vshra.s32 %v171, 16
  %v174 = vcvt.s32.f32 %v172
  %v175 = vcvt.s32.f32 %v173
  %176 = vmin.xlane.f32.xlu0 %v175
  %v177 = vpop.xlane.xlu0 %176
  %vm178 = vcmp.eq.f32.partialorder %v175, %v177
  %v179 = vsel %vm178, %v174, inf
  %180 = vmin.xlane.f32.xlu0 %v179
  %v181 = vpop.xlane.xlu0 %180
  %v182 = vcvt.f32.s32 %v181
  %v183 = vcvt.f32.s32 %v177
  %v184 = vshll.u32 %v183, 16
  %v185 = vadd.s32 %v184, %v182
  %v186 = vsel %vm112, %v170, 2147483647
  %v187 = vand.u32 %v186, 65535
  %v188 = vshra.s32 %v186, 16
  %v189 = vcvt.s32.f32 %v187
  %v190 = vcvt.s32.f32 %v188
  %191 = vmin.xlane.f32.xlu0 %v190
  %v192 = vpop.xlane.xlu0 %191
  %vm193 = vcmp.eq.f32.partialorder %v190, %v192
  %v194 = vsel %vm193, %v189, inf
  %195 = vmin.xlane.f32.xlu0 %v194
  %v196 = vpop.xlane.xlu0 %195
  %v197 = vcvt.f32.s32 %v196
  %v198 = vcvt.f32.s32 %v192
  %v199 = vshll.u32 %v198, 16
  %v200 = vadd.s32 %v199, %v197
  %v201 = vsub.f32 %v163, %v119
  %v202 = vsub.f32 %v166, %v122
  %v203 = vmul.f32 %v201, 1.442695
  %v204 = vpow.pop %v203
  %v205 = vmul.f32 %v202, 1.442695
  %v206 = vpow.pop %v205
  %v207 = vadd.f32 %v204, 1.0
  %v208 = vadd.f32 %v206, 1.0
  %v209 = vrcp.pop %v207
  %v210 = vmul.f32 1.0, %v209
  %v211 = vrcp.pop %v208
  %v212 = vmul.f32 1.0, %v211
  %v213 = vmul.f32 %v204, %v210
  %v214 = vmul.f32 %v206, %v212
  %vm215 = vcmp.eq.s32.totalorder %v116, 0
  %v216 = vsel %vm215, %v210, %v213
  %v217 = vsel %vm215, %v212, %v214
  %vm218 = vcmask 15360
  %219 = vst.msk [vmem:[%s3] sm:$0xff] %vm218, %v216
  %220 = vst.msk [vmem:[%s3 + $0x8] sm:$0xff] %vm218, %v217
  %v221 = vsel %vm215, %v141, %v185
  %v222 = vsel %vm215, %v156, %v200
  %223 = vst.msk [vmem:[%s4] sm:$0xff] %vm218, %v221
  %224 = vst.msk [vmem:[%s4 + $0x8] sm:$0xff] %vm218, %v222
  // Predicated region
  $region14: #{tpu_custom_call.1} parent=0 // pred_check
    _
  $region15: #{tpu_custom_call.1} parent=0 // pred_check_branch
    %226 = sbr.rel (0) target = $region17
  $region16: #{tpu_custom_call.1} parent=0 // pred_region
    _
  $region17: #{tpu_custom_call.1} parent=0 // pred_fallthru
    _
  // Predicated region
  $region18: #{tpu_custom_call.1} parent=0 // pred_check
    _
  $region19: #{tpu_custom_call.1} parent=0 // pred_check_branch
    %228 = sbr.rel (0) target = $region21
  $region20: #{tpu_custom_call.1} parent=0 // pred_region
    _
  $region21: #{tpu_custom_call.1} parent=0 // pred_fallthru
    _
  // Predicated region
  $region22: #{tpu_custom_call.1} parent=0 // pred_check
    _
  $region23: #{tpu_custom_call.1} parent=0 // pred_check_branch
    %230 = sbr.rel (0) target = $region25
  $region24: #{tpu_custom_call.1} parent=0 // pred_region
    _
  $region25: #{tpu_custom_call.1} parent=0 // pred_fallthru
    _
  // Predicated region
  $region26: #{tpu_custom_call.1} parent=0 // pred_check
    _
  $region27: #{tpu_custom_call.1} parent=0 // pred_check_branch
    %232 = sbr.rel (0) target = $region29
  $region28: #{tpu_custom_call.1} parent=0 // pred_region
    _
  $region29: #{tpu_custom_call.1} parent=0 // pred_fallthru
    _
  // Predicated region
  $region30: #{tpu_custom_call.1} parent=0 // pred_check
    _
  $region31: #{tpu_custom_call.1} parent=0 // pred_check_branch
    %234 = sbr.rel (0) target = $region33
  $region32: #{tpu_custom_call.1} parent=0 // pred_region
    _
  $region33: #{tpu_custom_call.1} parent=0 // pred_fallthru
    _
  // Predicated region
  $region34: #{tpu_custom_call.1} parent=0 // pred_check
    _
  $region35: #{tpu_custom_call.1} parent=0 // pred_check_branch
    %236 = sbr.rel (0) target = $region37
  $region36: #{tpu_custom_call.1} parent=0 // pred_region
    _
  $region37: #{tpu_custom_call.1} parent=0 // pred_fallthru
    _

</llo_original>
